<compile_context>
chip_gen: v7x
topology: tpu7x:2x2x1
jax: 0.10.0
libtpu: 0.0.40
codegen_flags: <defaults>
</compile_context>

<pallas_src>
import functools

import jax
import jax.numpy as jnp
from jax.experimental import pallas as pl
from jax.experimental.pallas import tpu as pltpu


def _fused_mlp_kernel(x_ref, w1_ref, b1_ref, w2_ref, b2_ref, w3_ref, b3_ref,
                      o_ref, *, use_3_layor):
    # Layer 1: [TM, 2d] @ [2d, d] on the MXU (bf16 operands, f32 accumulate),
    # bias add + ReLU on the VPU. Intermediates never leave VMEM/vregs.
    h = jnp.dot(x_ref[...], w1_ref[...], preferred_element_type=jnp.float32)
    h = jnp.maximum(h + b1_ref[...], 0.0)

    # Layer 2: [TM, d] @ [d, d]
    h = jnp.dot(h.astype(w2_ref.dtype), w2_ref[...],
                preferred_element_type=jnp.float32)
    h = jnp.maximum(h + b2_ref[...], 0.0)

    if use_3_layor:
        # Layer 3: [TM, d] @ [d, d]
        h = jnp.dot(h.astype(w3_ref.dtype), w3_ref[...],
                    preferred_element_type=jnp.float32)
        h = jnp.maximum(h + b3_ref[...], 0.0)

    o_ref[...] = h.astype(o_ref.dtype)


def _round_up(x, m):
    return (x + m - 1) // m * m


def _choose_batch_tile(b_pad, d, compute_itemsize=2, vmem_budget=24 << 20):
    """Pick a batch tile that (with resident weights + double-buffered activations)
    fits a conservative VMEM budget valid on v5e/v6e (128 MiB) and v7x (64 MiB)."""
    w_bytes = 4 * d * d * compute_itemsize          # w1 (2d*d) + w2 (d*d) + w3 (d*d), resident
    tm = min(b_pad, 512)
    while tm > 16:
        # double-buffered bf16 input tile + f32 output tile
        act_bytes = 2 * (tm * 2 * d * compute_itemsize + tm * d * 4)
        if w_bytes + act_bytes <= vmem_budget:
            break
        tm //= 2
    return max(tm, 16)


def _mlp_pallas(params, x, use_3_layor, compute_dtype=jnp.bfloat16):
    B, in_features = x.shape
    d = params["w1"].shape[1]
    assert in_features == 2 * d

    # Batch tiling: multiple of 16 (bf16 sublane packing), VMEM-budgeted.
    tm = _choose_batch_tile(_round_up(B, 16), d)
    b_pad = _round_up(B, tm)
    if b_pad != B:
        x = jnp.pad(x, ((0, b_pad - B), (0, 0)))

    # bf16 matmul operands (halves weight/activation DMA bytes, 2x MXU throughput);
    # biases stay f32 and are added to the f32 accumulator.
    xc = x.astype(compute_dtype)
    w1 = params["w1"].astype(compute_dtype)
    w2 = params["w2"].astype(compute_dtype)
    w3 = params["w3"].astype(compute_dtype)
    b1 = params["b1"].reshape(1, d).astype(jnp.float32)
    b2 = params["b2"].reshape(1, d).astype(jnp.float32)
    b3 = params["b3"].reshape(1, d).astype(jnp.float32)

    grid = (b_pad // tm,)
    n_layers = 3 if use_3_layor else 2
    flops = 2 * b_pad * d * d * (2 + (n_layers - 1))
    bytes_accessed = int(
        xc.size * xc.dtype.itemsize
        + sum(a.size * a.dtype.itemsize for a in (w1, w2, w3, b1, b2, b3))
        + b_pad * d * x.dtype.itemsize)

    out = pl.pallas_call(
        functools.partial(_fused_mlp_kernel, use_3_layor=use_3_layor),
        out_shape=jax.ShapeDtypeStruct((b_pad, d), x.dtype),
        grid_spec=pltpu.PrefetchScalarGridSpec(
            num_scalar_prefetch=0,
            grid=grid,
            in_specs=[
                # Activations: tiled over batch (double-buffered by the pipeline).
                pl.BlockSpec((tm, 2 * d), lambda i: (i, 0)),
                # Weights / biases: constant index_map -> resident in VMEM across grid steps.
                pl.BlockSpec((2 * d, d), lambda i: (0, 0)),
                pl.BlockSpec((1, d), lambda i: (0, 0)),
                pl.BlockSpec((d, d), lambda i: (0, 0)),
                pl.BlockSpec((1, d), lambda i: (0, 0)),
                pl.BlockSpec((d, d), lambda i: (0, 0)),
                pl.BlockSpec((1, d), lambda i: (0, 0)),
            ],
            out_specs=pl.BlockSpec((tm, d), lambda i: (i, 0)),
        ),
        compiler_params=pltpu.CompilerParams(
            dimension_semantics=("parallel",)),
        cost_estimate=pl.CostEstimate(
            flops=flops, transcendentals=0, bytes_accessed=bytes_accessed),
    )(xc, w1, b1, w2, b2, w3, b3)

    return out[:B] if b_pad != B else out


@functools.partial(jax.jit, static_argnames=("use_3_layor",))
def mlp_forward(params, x, use_3_layor=True):
    return _mlp_pallas(params, x, use_3_layor)


def init_mlp_params(key, d, dtype=jnp.float32):
    """Deterministic init mirroring nn.Linear default (uniform +-1/sqrt(fan_in))."""
    ks = jax.random.split(key, 6)

    def lin(kw, kb, fan_in, fan_out):
        bound = 1.0 / jnp.sqrt(jnp.asarray(fan_in, dtype))
        w = jax.random.uniform(kw, (fan_in, fan_out), dtype, -bound, bound)
        b = jax.random.uniform(kb, (fan_out,), dtype, -bound, bound)
        return w, b

    w1, b1 = lin(ks[0], ks[1], 2 * d, d)
    w2, b2 = lin(ks[2], ks[3], d, d)
    w3, b3 = lin(ks[4], ks[5], d, d)
    return dict(w1=w1, b1=b1, w2=w2, b2=b2, w3=w3, b3=b3)


if __name__ == "__main__":
    d = 128          # hidden size (args.d) -> features are lane-aligned (128 / 256)
    batch = 8
    use_3_layor = True

    key = jax.random.PRNGKey(0)
    k_params, k_x = jax.random.split(key)
    params = init_mlp_params(k_params, d)
    x = jax.random.normal(k_x, (batch, 2 * d), jnp.float32)

    out = mlp_forward(params, x, use_3_layor=use_3_layor)
    jax.block_until_ready(out)

    # Pure-JAX f32 reference (same math as the PyTorch forward).
    ref = jnp.maximum(x @ params["w1"] + params["b1"], 0.0)
    ref = jnp.maximum(ref @ params["w2"] + params["b2"], 0.0)
    if use_3_layor:
        ref = jnp.maximum(ref @ params["w3"] + params["b3"], 0.0)

    assert out.shape == (batch, d)
    # bf16 matmul operands with f32 accumulation -> loosened tolerance vs the f32 reference.
    assert jnp.allclose(out, ref, atol=5e-2, rtol=5e-2), float(jnp.max(jnp.abs(out - ref)))

    print("KERNEL_OK")
</pallas_src>

<mosaic_0001>
module attributes {stable_mosaic.version = 11 : i64} {
  func.func @_fused_mlp_kernel(%arg0: i32, %arg1: memref<16x256xbf16, #tpu.memory_space<vmem>>, %arg2: memref<256x128xbf16, #tpu.memory_space<vmem>>, %arg3: memref<1x128xf32, #tpu.memory_space<vmem>>, %arg4: memref<128x128xbf16, #tpu.memory_space<vmem>>, %arg5: memref<1x128xf32, #tpu.memory_space<vmem>>, %arg6: memref<128x128xbf16, #tpu.memory_space<vmem>>, %arg7: memref<1x128xf32, #tpu.memory_space<vmem>>, %arg8: memref<16x128xf32, #tpu.memory_space<vmem>>) attributes {dimension_semantics = [#tpu.dimension_semantics<parallel>], iteration_bounds = array<i64: 1>, scalar_prefetch = 0 : i64, scratch_operands = 0 : i64, tpu.core_type = #tpu.core_type<tc>, window_params = [{transform_indices = @transform_0, window_bounds = array<i64: 16, 256>}, {pipeline_mode = #tpu.pipeline_mode<synchronous>, transform_indices = @transform_1, window_bounds = array<i64: 256, 128>}, {pipeline_mode = #tpu.pipeline_mode<synchronous>, transform_indices = @transform_2, window_bounds = array<i64: 1, 128>}, {pipeline_mode = #tpu.pipeline_mode<synchronous>, transform_indices = @transform_3, window_bounds = array<i64: 128, 128>}, {pipeline_mode = #tpu.pipeline_mode<synchronous>, transform_indices = @transform_4, window_bounds = array<i64: 1, 128>}, {pipeline_mode = #tpu.pipeline_mode<synchronous>, transform_indices = @transform_5, window_bounds = array<i64: 128, 128>}, {pipeline_mode = #tpu.pipeline_mode<synchronous>, transform_indices = @transform_6, window_bounds = array<i64: 1, 128>}, {transform_indices = @transform_7, window_bounds = array<i64: 16, 128>}]} {
    %c0 = arith.constant 0 : index
    %c0_0 = arith.constant 0 : index
    %0 = vector.load %arg1[%c0, %c0_0] : memref<16x256xbf16, #tpu.memory_space<vmem>>, vector<16x256xbf16>
    %c0_1 = arith.constant 0 : index
    %c0_2 = arith.constant 0 : index
    %1 = vector.load %arg2[%c0_1, %c0_2] : memref<256x128xbf16, #tpu.memory_space<vmem>>, vector<256x128xbf16>
    %cst = arith.constant dense<0.000000e+00> : vector<16x128xf32>
    %2 = tpu.matmul %0, %1, %cst {dimension_numbers = #tpu.dot_dimension_numbers<[1], [0], [0], [1], [0, 0, 1, 1], [], []>} : vector<16x256xbf16>, vector<256x128xbf16>, vector<16x128xf32> -> vector<16x128xf32>
    %c0_3 = arith.constant 0 : index
    %c0_4 = arith.constant 0 : index
    %3 = vector.load %arg3[%c0_3, %c0_4] : memref<1x128xf32, #tpu.memory_space<vmem>>, vector<1x128xf32>
    %4 = vector.broadcast %3 : vector<1x128xf32> to vector<16x128xf32>
    %5 = arith.addf %2, %4 : vector<16x128xf32>
    %cst_5 = arith.constant 0.000000e+00 : f32
    %6 = vector.broadcast %cst_5 : f32 to vector<16x128xf32>
    %7 = arith.maximumf %5, %6 : vector<16x128xf32>
    %8 = arith.truncf %7 : vector<16x128xf32> to vector<16x128xbf16>
    %c0_6 = arith.constant 0 : index
    %c0_7 = arith.constant 0 : index
    %9 = vector.load %arg4[%c0_6, %c0_7] : memref<128x128xbf16, #tpu.memory_space<vmem>>, vector<128x128xbf16>
    %cst_8 = arith.constant dense<0.000000e+00> : vector<16x128xf32>
    %10 = tpu.matmul %8, %9, %cst_8 {dimension_numbers = #tpu.dot_dimension_numbers<[1], [0], [0], [1], [0, 0, 1, 1], [], []>} : vector<16x128xbf16>, vector<128x128xbf16>, vector<16x128xf32> -> vector<16x128xf32>
    %c0_9 = arith.constant 0 : index
    %c0_10 = arith.constant 0 : index
    %11 = vector.load %arg5[%c0_9, %c0_10] : memref<1x128xf32, #tpu.memory_space<vmem>>, vector<1x128xf32>
    %12 = vector.broadcast %11 : vector<1x128xf32> to vector<16x128xf32>
    %13 = arith.addf %10, %12 : vector<16x128xf32>
    %cst_11 = arith.constant 0.000000e+00 : f32
    %14 = vector.broadcast %cst_11 : f32 to vector<16x128xf32>
    %15 = arith.maximumf %13, %14 : vector<16x128xf32>
    %16 = arith.truncf %15 : vector<16x128xf32> to vector<16x128xbf16>
    %c0_12 = arith.constant 0 : index
    %c0_13 = arith.constant 0 : index
    %17 = vector.load %arg6[%c0_12, %c0_13] : memref<128x128xbf16, #tpu.memory_space<vmem>>, vector<128x128xbf16>
    %cst_14 = arith.constant dense<0.000000e+00> : vector<16x128xf32>
    %18 = tpu.matmul %16, %17, %cst_14 {dimension_numbers = #tpu.dot_dimension_numbers<[1], [0], [0], [1], [0, 0, 1, 1], [], []>} : vector<16x128xbf16>, vector<128x128xbf16>, vector<16x128xf32> -> vector<16x128xf32>
    %c0_15 = arith.constant 0 : index
    %c0_16 = arith.constant 0 : index
    %19 = vector.load %arg7[%c0_15, %c0_16] : memref<1x128xf32, #tpu.memory_space<vmem>>, vector<1x128xf32>
    %20 = vector.broadcast %19 : vector<1x128xf32> to vector<16x128xf32>
    %21 = arith.addf %18, %20 : vector<16x128xf32>
    %cst_17 = arith.constant 0.000000e+00 : f32
    %22 = vector.broadcast %cst_17 : f32 to vector<16x128xf32>
    %23 = arith.maximumf %21, %22 : vector<16x128xf32>
    %c0_18 = arith.constant 0 : index
    %c0_19 = arith.constant 0 : index
    %24 = vector.load %arg8[%c0_18, %c0_19] : memref<16x128xf32, #tpu.memory_space<vmem>>, vector<16x128xf32>
    tpu.vector_store %arg8[%c0_18, %c0_19], %23 {strides = array<i32>} : memref<16x128xf32, #tpu.memory_space<vmem>>, vector<16x128xf32>,
    return
  }
  func.func @transform_0(%arg0: i32) -> (i32, i32) {
    %c0_i32 = arith.constant 0 : i32
    %c0_i32_0 = arith.constant 0 : i32
    return %arg0, %c0_i32 : i32, i32
  }
  func.func @transform_1(%arg0: i32) -> (i32, i32) {
    %c0_i32 = arith.constant 0 : i32
    %c0_i32_0 = arith.constant 0 : i32
    %c0_i32_1 = arith.constant 0 : i32
    return %c0_i32, %c0_i32_0 : i32, i32
  }
  func.func @transform_2(%arg0: i32) -> (i32, i32) {
    %c0_i32 = arith.constant 0 : i32
    %c0_i32_0 = arith.constant 0 : i32
    %c0_i32_1 = arith.constant 0 : i32
    return %c0_i32, %c0_i32_0 : i32, i32
  }
  func.func @transform_3(%arg0: i32) -> (i32, i32) {
    %c0_i32 = arith.constant 0 : i32
    %c0_i32_0 = arith.constant 0 : i32
    %c0_i32_1 = arith.constant 0 : i32
    return %c0_i32, %c0_i32_0 : i32, i32
  }
  func.func @transform_4(%arg0: i32) -> (i32, i32) {
    %c0_i32 = arith.constant 0 : i32
    %c0_i32_0 = arith.constant 0 : i32
    %c0_i32_1 = arith.constant 0 : i32
    return %c0_i32, %c0_i32_0 : i32, i32
  }
  func.func @transform_5(%arg0: i32) -> (i32, i32) {
    %c0_i32 = arith.constant 0 : i32
    %c0_i32_0 = arith.constant 0 : i32
    %c0_i32_1 = arith.constant 0 : i32
    return %c0_i32, %c0_i32_0 : i32, i32
  }
  func.func @transform_6(%arg0: i32) -> (i32, i32) {
    %c0_i32 = arith.constant 0 : i32
    %c0_i32_0 = arith.constant 0 : i32
    %c0_i32_1 = arith.constant 0 : i32
    return %c0_i32, %c0_i32_0 : i32, i32
  }
  func.func @transform_7(%arg0: i32) -> (i32, i32) {
    %c0_i32 = arith.constant 0 : i32
    %c0_i32_0 = arith.constant 0 : i32
    return %arg0, %c0_i32 : i32, i32
  }
}

</mosaic_0001>

<llo_original>
// kernel: mlp_forward.1
$region0: #{mlp_forward.1}
  #allocation0 [shape = 'u32[]', space=smem, size = 0x4, offset = 0x4, fixed_abs, tag = 'smem constant byte address 0x4 - core index']
  #allocation1 [shape = 'u32[144,128]{1,0:T(1,128)}', space=vmem, size = 0x12000, scoped, tag = 'internal scratch']
  %s0 = inlined_call_operand.vmem [shape: bf16[16,256], index: 0, kind: input, shape index: {}]
  %s1 = inlined_call_operand.vmem [shape: bf16[256,128], index: 1, kind: input, shape index: {}]
  %s2 = inlined_call_operand.vmem [shape: f32[1,128], index: 2, kind: input, shape index: {}]
  %s3 = inlined_call_operand.vmem [shape: bf16[128,128], index: 3, kind: input, shape index: {}]
  %s4 = inlined_call_operand.vmem [shape: f32[1,128], index: 4, kind: input, shape index: {}]
  %s5 = inlined_call_operand.vmem [shape: bf16[128,128], index: 5, kind: input, shape index: {}]
  %s6 = inlined_call_operand.vmem [shape: f32[1,128], index: 6, kind: input, shape index: {}]
  %s7 = inlined_call_operand.vmem [shape: f32[16,128], index: 7, kind: output, shape index: {}]
  %s8 = sld [smem:[#allocation0]]
  $region38: #{mlp_forward.1} parent=0
    _
  %s10 = ssub.s32 1, %s8
  %s11 = scalar_select 0, %s10, %s8
  // Predicated region
  $region2: #{mlp_forward.1} parent=0 // pred_check
    _
  $region3: #{mlp_forward.1} parent=0 // pred_check_branch
    %13 = sbr.rel (0) target = $region5
  $region4: #{mlp_forward.1} parent=0 // pred_region
    _
  $region5: #{mlp_forward.1} parent=0 // pred_fallthru
    _
  // Predicated region
  $region6: #{mlp_forward.1} parent=0 // pred_check
    _
  $region7: #{mlp_forward.1} parent=0 // pred_check_branch
    %15 = sbr.rel (0) target = $region9
  $region8: #{mlp_forward.1} parent=0 // pred_region
    _
  $region9: #{mlp_forward.1} parent=0 // pred_fallthru
    _
  // Predicated region
  $region10: #{mlp_forward.1} parent=0 // pred_check
    _
  $region11: #{mlp_forward.1} parent=0 // pred_check_branch
    %17 = sbr.rel (0) target = $region13
  $region12: #{mlp_forward.1} parent=0 // pred_region
    _
  $region13: #{mlp_forward.1} parent=0 // pred_fallthru
    _
  // Predicated region
  $region14: #{mlp_forward.1} parent=0 // pred_check
    _
  $region15: #{mlp_forward.1} parent=0 // pred_check_branch
    %19 = sbr.rel (0) target = $region17
  $region16: #{mlp_forward.1} parent=0 // pred_region
    _
  $region17: #{mlp_forward.1} parent=0 // pred_fallthru
    _
  // Predicated region
  $region18: #{mlp_forward.1} parent=0 // pred_check
    _
  $region19: #{mlp_forward.1} parent=0 // pred_check_branch
    %21 = sbr.rel (0) target = $region21
  $region20: #{mlp_forward.1} parent=0 // pred_region
    _
  $region21: #{mlp_forward.1} parent=0 // pred_fallthru
    _
  // Predicated region
  $region22: #{mlp_forward.1} parent=0 // pred_check
    _
  $region23: #{mlp_forward.1} parent=0 // pred_check_branch
    %23 = sbr.rel (0) target = $region25
  $region24: #{mlp_forward.1} parent=0 // pred_region
    _
  $region25: #{mlp_forward.1} parent=0 // pred_fallthru
    _
  // Predicated region
  $region26: #{mlp_forward.1} parent=0 // pred_check
    _
  $region27: #{mlp_forward.1} parent=0 // pred_check_branch
    %25 = sbr.rel (0) target = $region29
  $region28: #{mlp_forward.1} parent=0 // pred_region
    _
  $region29: #{mlp_forward.1} parent=0 // pred_fallthru
    _
  %v27 = vld [vmem:[%s0] sm:$0xff]
  %v28 = vld [vmem:[%s0 + $0x8] sm:$0xff]
  %v29 = vld [vmem:[%s1] sm:$0xf]
  %v30 = vld [vmem:[%s1 + $0x4] sm:$0xf]
  %v31 = vld [vmem:[%s1 + $0x8] sm:$0xf]
  %v32 = vld [vmem:[%s1 + $0xc] sm:$0xf]
  %v33 = vld [vmem:[%s1 + $0x10] sm:$0xf]
  %v34 = vld [vmem:[%s1 + $0x14] sm:$0xf]
  %v35 = vld [vmem:[%s1 + $0x18] sm:$0xf]
  %v36 = vld [vmem:[%s1 + $0x1c] sm:$0xf]
  %v37 = vld [vmem:[%s1 + $0x20] sm:$0xf]
  %v38 = vld [vmem:[%s1 + $0x24] sm:$0xf]
  %v39 = vld [vmem:[%s1 + $0x28] sm:$0xf]
  %v40 = vld [vmem:[%s1 + $0x2c] sm:$0xf]
  %v41 = vld [vmem:[%s1 + $0x30] sm:$0xf]
  %v42 = vld [vmem:[%s1 + $0x34] sm:$0xf]
  %v43 = vld [vmem:[%s1 + $0x38] sm:$0xf]
  %v44 = vld [vmem:[%s1 + $0x3c] sm:$0xf]
  %v45 = vld [vmem:[%s1 + $0x40] sm:$0xf]
  %v46 = vld [vmem:[%s1 + $0x44] sm:$0xf]
  %v47 = vld [vmem:[%s1 + $0x48] sm:$0xf]
  %v48 = vld [vmem:[%s1 + $0x4c] sm:$0xf]
  %v49 = vld [vmem:[%s1 + $0x50] sm:$0xf]
  %v50 = vld [vmem:[%s1 + $0x54] sm:$0xf]
  %v51 = vld [vmem:[%s1 + $0x58] sm:$0xf]
  %v52 = vld [vmem:[%s1 + $0x5c] sm:$0xf]
  %v53 = vld [vmem:[%s1 + $0x60] sm:$0xf]
  %v54 = vld [vmem:[%s1 + $0x64] sm:$0xf]
  %v55 = vld [vmem:[%s1 + $0x68] sm:$0xf]
  %v56 = vld [vmem:[%s1 + $0x6c] sm:$0xf]
  %v57 = vld [vmem:[%s1 + $0x70] sm:$0xf]
  %v58 = vld [vmem:[%s1 + $0x74] sm:$0xf]
  %v59 = vld [vmem:[%s1 + $0x78] sm:$0xf]
  %v60 = vld [vmem:[%s1 + $0x7c] sm:$0xf]
  %v61 = vld [vmem:[%s2] sm:$0x1]
  %v63 = vlaneseq
  %v64 = vshrl.u32 %v63, 7
  %v65 = vsub.s32 0, %v64
  %v66 = vrot.slane %v61, %v65
  %v70 = vunpack.c.l.b16 %v27
  %v71 = vunpack.c.h.b16 %v27
  %v72 = vunpack.c.l.b16 %v28
  %v73 = vunpack.c.h.b16 %v28
  %v74 = vpack.c.b16 %v72, %v70
  %v75 = vpack.c.b16 %v73, %v71
  %v110 = vunpack.c.l.b16 %v29
  %v111 = vunpack.c.l.b16 %v30
  %v112 = vunpack.c.l.b16 %v31
  %v113 = vunpack.c.l.b16 %v32
  %v114 = vunpack.c.l.b16 %v33
  %v115 = vunpack.c.l.b16 %v34
  %v116 = vunpack.c.l.b16 %v35
  %v117 = vunpack.c.l.b16 %v36
  %v118 = vunpack.c.l.b16 %v37
  %v119 = vunpack.c.l.b16 %v38
  %v120 = vunpack.c.l.b16 %v39
  %v121 = vunpack.c.l.b16 %v40
  %v122 = vunpack.c.l.b16 %v41
  %v123 = vunpack.c.l.b16 %v42
  %v124 = vunpack.c.l.b16 %v43
  %v125 = vunpack.c.l.b16 %v44
  %v126 = vunpack.c.l.b16 %v45
  %v127 = vunpack.c.l.b16 %v46
  %v128 = vunpack.c.l.b16 %v47
  %v129 = vunpack.c.l.b16 %v48
  %v130 = vunpack.c.l.b16 %v49
  %v131 = vunpack.c.l.b16 %v50
  %v132 = vunpack.c.l.b16 %v51
  %v133 = vunpack.c.l.b16 %v52
  %v134 = vunpack.c.l.b16 %v53
  %v135 = vunpack.c.l.b16 %v54
  %v136 = vunpack.c.l.b16 %v55
  %v137 = vunpack.c.l.b16 %v56
  %v138 = vunpack.c.l.b16 %v57
  %v139 = vunpack.c.l.b16 %v58
  %v140 = vunpack.c.l.b16 %v59
  %v141 = vunpack.c.l.b16 %v60
  %v142 = vpack.c.b16 %v111, %v110
  %v143 = vpack.c.b16 %v113, %v112
  %v144 = vpack.c.b16 %v115, %v114
  %v145 = vpack.c.b16 %v117, %v116
  %v146 = vpack.c.b16 %v119, %v118
  %v147 = vpack.c.b16 %v121, %v120
  %v148 = vpack.c.b16 %v123, %v122
  %v149 = vpack.c.b16 %v125, %v124
  %v150 = vpack.c.b16 %v127, %v126
  %v151 = vpack.c.b16 %v129, %v128
  %v152 = vpack.c.b16 %v131, %v130
  %v153 = vpack.c.b16 %v133, %v132
  %v154 = vpack.c.b16 %v135, %v134
  %v155 = vpack.c.b16 %v137, %v136
  %v156 = vpack.c.b16 %v139, %v138
  %v157 = vpack.c.b16 %v141, %v140
  %174 = vmatprep.subr.bf16.mxu0 0
  %175 = vmatpush1.bf16.msra.mxu0 %v142
  %176 = vmatprep.subr.bf16.mxu0 0
  %177 = vmatpush1.bf16.msra.mxu0 %v143
  %178 = vmatprep.subr.bf16.mxu0 0
  %179 = vmatpush1.bf16.msra.mxu0 %v144
  %180 = vmatprep.subr.bf16.mxu0 0
  %181 = vmatpush1.bf16.msra.mxu0 %v145
  %182 = vmatprep.subr.bf16.mxu0 0
  %183 = vmatpush1.bf16.msra.mxu0 %v146
  %184 = vmatprep.subr.bf16.mxu0 0
  %185 = vmatpush1.bf16.msra.mxu0 %v147
  %186 = vmatprep.subr.bf16.mxu0 0
  %187 = vmatpush1.bf16.msra.mxu0 %v148
  %188 = vmatprep.subr.bf16.mxu0 0
  %189 = vmatpush1.bf16.msra.mxu0 %v149
  %190 = vmatprep.subr.bf16.mxu0 0
  %191 = vmatpush1.bf16.msra.mxu0 %v150
  %192 = vmatprep.subr.bf16.mxu0 0
  %193 = vmatpush1.bf16.msra.mxu0 %v151
  %194 = vmatprep.subr.bf16.mxu0 0
  %195 = vmatpush1.bf16.msra.mxu0 %v152
  %196 = vmatprep.subr.bf16.mxu0 0
  %197 = vmatpush1.bf16.msra.mxu0 %v153
  %198 = vmatprep.subr.bf16.mxu0 0
  %199 = vmatpush1.bf16.msra.mxu0 %v154
  %200 = vmatprep.subr.bf16.mxu0 0
  %201 = vmatpush1.bf16.msra.mxu0 %v155
  %202 = vmatprep.subr.bf16.mxu0 0
  %203 = vmatpush1.bf16.msra.mxu0 %v156
  %204 = vmatprep.subr.bf16.mxu0 0
  %205 = vmatpush1.bf16.msra.mxu0 %v157
  %206 = vmatprep.mubr.bf16.mxu0 %v75
  %207 = vmatmul.mubr.bf16.gmra.mrb[0].mxu0 %v74
  %v208 = vpop.f32.mrb[0].mxu0
  %v209 = vadd.f32 %v66, %v208
  %v210 = vpop.f32.mrb[0].mxu0
  %v211 = vpop.f32.mrb[0].mxu0
  %v212 = vadd.f32 %v66, %v211
  %v213 = vpop.f32.mrb[0].mxu0
  %214 = vdwg.mxu0
  %v215 = vmax.f32 %v209, 0.0
  %v216 = vmax.f32 %v212, 0.0
  %v217 = vpack.c.bf16 %v216, %v215
  %v218 = vld [vmem:[%s3] sm:$0xf]
  %v219 = vld [vmem:[%s3 + $0x4] sm:$0xf]
  %v220 = vld [vmem:[%s3 + $0x8] sm:$0xf]
  %v221 = vld [vmem:[%s3 + $0xc] sm:$0xf]
  %v222 = vld [vmem:[%s3 + $0x10] sm:$0xf]
  %v223 = vld [vmem:[%s3 + $0x14] sm:$0xf]
  %v224 = vld [vmem:[%s3 + $0x18] sm:$0xf]
  %v225 = vld [vmem:[%s3 + $0x1c] sm:$0xf]
  %v226 = vld [vmem:[%s3 + $0x20] sm:$0xf]
  %v227 = vld [vmem:[%s3 + $0x24] sm:$0xf]
  %v228 = vld [vmem:[%s3 + $0x28] sm:$0xf]
  %v229 = vld [vmem:[%s3 + $0x2c] sm:$0xf]
  %v230 = vld [vmem:[%s3 + $0x30] sm:$0xf]
  %v231 = vld [vmem:[%s3 + $0x34] sm:$0xf]
  %v232 = vld [vmem:[%s3 + $0x38] sm:$0xf]
  %v233 = vld [vmem:[%s3 + $0x3c] sm:$0xf]
  %v234 = vld [vmem:[%s4] sm:$0x1]
  %v236 = vlaneseq
  %v237 = vshrl.u32 %v236, 7
  %v238 = vsub.s32 0, %v237
  %v239 = vrot.slane %v234, %v238
  %v257 = vunpack.c.l.b16 %v218
  %v258 = vunpack.c.l.b16 %v219
  %v259 = vunpack.c.l.b16 %v220
  %v260 = vunpack.c.l.b16 %v221
  %v261 = vunpack.c.l.b16 %v222
  %v262 = vunpack.c.l.b16 %v223
  %v263 = vunpack.c.l.b16 %v224
  %v264 = vunpack.c.l.b16 %v225
  %v265 = vunpack.c.l.b16 %v226
  %v266 = vunpack.c.l.b16 %v227
  %v267 = vunpack.c.l.b16 %v228
  %v268 = vunpack.c.l.b16 %v229
  %v269 = vunpack.c.l.b16 %v230
  %v270 = vunpack.c.l.b16 %v231
  %v271 = vunpack.c.l.b16 %v232
  %v272 = vunpack.c.l.b16 %v233
  %v273 = vpack.c.b16 %v258, %v257
  %v274 = vpack.c.b16 %v260, %v259
  %v275 = vpack.c.b16 %v262, %v261
  %v276 = vpack.c.b16 %v264, %v263
  %v277 = vpack.c.b16 %v266, %v265
  %v278 = vpack.c.b16 %v268, %v267
  %v279 = vpack.c.b16 %v270, %v269
  %v280 = vpack.c.b16 %v272, %v271
  %289 = vmatprep.subr.bf16.mxu0 0
  %290 = vmatpush1.bf16.msra.mxu0 %v273
  %291 = vmatprep.subr.bf16.mxu0 0
  %292 = vmatpush1.bf16.msra.mxu0 %v274
  %293 = vmatprep.subr.bf16.mxu0 0
  %294 = vmatpush1.bf16.msra.mxu0 %v275
  %295 = vmatprep.subr.bf16.mxu0 0
  %296 = vmatpush1.bf16.msra.mxu0 %v276
  %297 = vmatprep.subr.bf16.mxu0 0
  %298 = vmatpush1.bf16.msra.mxu0 %v277
  %299 = vmatprep.subr.bf16.mxu0 0
  %300 = vmatpush1.bf16.msra.mxu0 %v278
  %301 = vmatprep.subr.bf16.mxu0 0
  %302 = vmatpush1.bf16.msra.mxu0 %v279
  %303 = vmatprep.subr.bf16.mxu0 0
  %304 = vmatpush1.bf16.msra.mxu0 %v280
  %305 = vmatprep.subr.bf16.mxu0 0
  %306 = vmatpush1.bf16.msra.mxu0 0
  %307 = vmatprep.subr.bf16.mxu0 0
  %308 = vmatpush1.bf16.msra.mxu0 0
  %309 = vmatprep.subr.bf16.mxu0 0
  %310 = vmatpush1.bf16.msra.mxu0 0
  %311 = vmatprep.subr.bf16.mxu0 0
  %312 = vmatpush1.bf16.msra.mxu0 0
  %313 = vmatprep.subr.bf16.mxu0 0
  %314 = vmatpush1.bf16.msra.mxu0 0
  %315 = vmatprep.subr.bf16.mxu0 0
  %316 = vmatpush1.bf16.msra.mxu0 0
  %317 = vmatprep.subr.bf16.mxu0 0
  %318 = vmatpush1.bf16.msra.mxu0 0
  %319 = vmatprep.subr.bf16.mxu0 0
  %320 = vmatpush1.bf16.msra.mxu0 0
  %321 = vmatprep.mubr.bf16.mxu0 0
  %322 = vmatmul.mubr.bf16.gmra.mrb[0].mxu0 %v217
  %v323 = vpop.f32.mrb[0].mxu0
  %v324 = vadd.f32 %v239, %v323
  %v325 = vpop.f32.mrb[0].mxu0
  %v326 = vpop.f32.mrb[0].mxu0
  %v327 = vadd.f32 %v239, %v326
  %v328 = vpop.f32.mrb[0].mxu0
  %329 = vdwg.mxu0
  %v330 = vmax.f32 %v324, 0.0
  %v331 = vmax.f32 %v327, 0.0
  %v332 = vpack.c.bf16 %v331, %v330
  %v333 = vld [vmem:[%s5] sm:$0xf]
  %v334 = vld [vmem:[%s5 + $0x4] sm:$0xf]
  %v335 = vld [vmem:[%s5 + $0x8] sm:$0xf]
  %v336 = vld [vmem:[%s5 + $0xc] sm:$0xf]
  %v337 = vld [vmem:[%s5 + $0x10] sm:$0xf]
  %v338 = vld [vmem:[%s5 + $0x14] sm:$0xf]
  %v339 = vld [vmem:[%s5 + $0x18] sm:$0xf]
  %v340 = vld [vmem:[%s5 + $0x1c] sm:$0xf]
  %v341 = vld [vmem:[%s5 + $0x20] sm:$0xf]
  %v342 = vld [vmem:[%s5 + $0x24] sm:$0xf]
  %v343 = vld [vmem:[%s5 + $0x28] sm:$0xf]
  %v344 = vld [vmem:[%s5 + $0x2c] sm:$0xf]
  %v345 = vld [vmem:[%s5 + $0x30] sm:$0xf]
  %v346 = vld [vmem:[%s5 + $0x34] sm:$0xf]
  %v347 = vld [vmem:[%s5 + $0x38] sm:$0xf]
  %v348 = vld [vmem:[%s5 + $0x3c] sm:$0xf]
  %v349 = vld [vmem:[%s6] sm:$0x1]
  %v351 = vlaneseq
  %v352 = vshrl.u32 %v351, 7
  %v353 = vsub.s32 0, %v352
  %v354 = vrot.slane %v349, %v353
  %v372 = vunpack.c.l.b16 %v333
  %v373 = vunpack.c.l.b16 %v334
  %v374 = vunpack.c.l.b16 %v335
  %v375 = vunpack.c.l.b16 %v336
  %v376 = vunpack.c.l.b16 %v337
  %v377 = vunpack.c.l.b16 %v338
  %v378 = vunpack.c.l.b16 %v339
  %v379 = vunpack.c.l.b16 %v340
  %v380 = vunpack.c.l.b16 %v341
  %v381 = vunpack.c.l.b16 %v342
  %v382 = vunpack.c.l.b16 %v343
  %v383 = vunpack.c.l.b16 %v344
  %v384 = vunpack.c.l.b16 %v345
  %v385 = vunpack.c.l.b16 %v346
  %v386 = vunpack.c.l.b16 %v347
  %v387 = vunpack.c.l.b16 %v348
  %v388 = vpack.c.b16 %v373, %v372
  %v389 = vpack.c.b16 %v375, %v374
  %v390 = vpack.c.b16 %v377, %v376
  %v391 = vpack.c.b16 %v379, %v378
  %v392 = vpack.c.b16 %v381, %v380
  %v393 = vpack.c.b16 %v383, %v382
  %v394 = vpack.c.b16 %v385, %v384
  %v395 = vpack.c.b16 %v387, %v386
  %404 = vmatprep.subr.bf16.mxu0 0
  %405 = vmatpush1.bf16.msra.mxu0 %v388
  %406 = vmatprep.subr.bf16.mxu0 0
  %407 = vmatpush1.bf16.msra.mxu0 %v389
  %408 = vmatprep.subr.bf16.mxu0 0
  %409 = vmatpush1.bf16.msra.mxu0 %v390
  %410 = vmatprep.subr.bf16.mxu0 0
  %411 = vmatpush1.bf16.msra.mxu0 %v391
  %412 = vmatprep.subr.bf16.mxu0 0
  %413 = vmatpush1.bf16.msra.mxu0 %v392
  %414 = vmatprep.subr.bf16.mxu0 0
  %415 = vmatpush1.bf16.msra.mxu0 %v393
  %416 = vmatprep.subr.bf16.mxu0 0
  %417 = vmatpush1.bf16.msra.mxu0 %v394
  %418 = vmatprep.subr.bf16.mxu0 0
  %419 = vmatpush1.bf16.msra.mxu0 %v395
  %420 = vmatprep.subr.bf16.mxu0 0
  %421 = vmatpush1.bf16.msra.mxu0 0
  %422 = vmatprep.subr.bf16.mxu0 0
  %423 = vmatpush1.bf16.msra.mxu0 0
  %424 = vmatprep.subr.bf16.mxu0 0
  %425 = vmatpush1.bf16.msra.mxu0 0
  %426 = vmatprep.subr.bf16.mxu0 0
  %427 = vmatpush1.bf16.msra.mxu0 0
  %428 = vmatprep.subr.bf16.mxu0 0
  %429 = vmatpush1.bf16.msra.mxu0 0
  %430 = vmatprep.subr.bf16.mxu0 0
  %431 = vmatpush1.bf16.msra.mxu0 0
  %432 = vmatprep.subr.bf16.mxu0 0
  %433 = vmatpush1.bf16.msra.mxu0 0
  %434 = vmatprep.subr.bf16.mxu0 0
  %435 = vmatpush1.bf16.msra.mxu0 0
  %436 = vmatprep.mubr.bf16.mxu0 0
  %437 = vmatmul.mubr.bf16.gmra.mrb[0].mxu0 %v332
  %v438 = vpop.f32.mrb[0].mxu0
  %v439 = vadd.f32 %v354, %v438
  %v440 = vpop.f32.mrb[0].mxu0
  %v441 = vpop.f32.mrb[0].mxu0
  %v442 = vadd.f32 %v354, %v441
  %v443 = vpop.f32.mrb[0].mxu0
  %444 = vdwg.mxu0
  %v445 = vmax.f32 %v439, 0.0
  %v446 = vmax.f32 %v442, 0.0
  %447 = vst [vmem:[%s7] sm:$0xff] %v445
  %448 = vst [vmem:[%s7 + $0x8] sm:$0xff] %v446
  // Predicated region
  $region30: #{mlp_forward.1} parent=0 // pred_check
    _
  $region31: #{mlp_forward.1} parent=0 // pred_check_branch
    %450 = sbr.rel (0) target = $region33
  $region32: #{mlp_forward.1} parent=0 // pred_region
    _
  $region33: #{mlp_forward.1} parent=0 // pred_fallthru
    _
  // Predicated region
  $region34: #{mlp_forward.1} parent=0 // pred_check
    _
  $region35: #{mlp_forward.1} parent=0 // pred_check_branch
    %452 = sbr.rel (0) target = $region37
  $region36: #{mlp_forward.1} parent=0 // pred_region
    _
  $region37: #{mlp_forward.1} parent=0 // pred_fallthru
    _

</llo_original>
